<compile_context>
chip_gen: v5e
topology: v5e:2x2
jax: 0.10.0
libtpu: 0.0.40
codegen_flags: <defaults>
</compile_context>

<pallas_src>
import jax
import jax.numpy as jnp
from jax.experimental import pallas as pl
from jax.experimental.pallas import tpu as pltpu


def _round_up(a: int, b: int) -> int:
    return (a + b - 1) // b * b


def highway_kernel(x_ref, w_ref, b_ref, o_ref):
    # x_ref: (tm, E) input rows
    # w_ref: (E, 2E) fused weight  [Wp^T | Wg^T]   (resident across grid)
    # b_ref: (1, 2E) fused bias (f32)              (resident across grid)
    # o_ref: (tm, E) output rows
    E = o_ref.shape[-1]
    x = x_ref[...]

    # One fused matmul on the MXU (storage dtype in, f32 accumulation out).
    z = jnp.dot(x.astype(w_ref.dtype), w_ref[...],
                preferred_element_type=jnp.float32)
    z = z + b_ref[...]

    proj = jnp.maximum(z[:, :E], 0.0)          # ReLU(x @ Wp + bp)
    gate = jax.nn.sigmoid(z[:, E:])            # sigmoid(x @ Wg + bg)

    xf = x.astype(jnp.float32)
    out = xf + gate * (proj - xf)              # == gate*proj + (1-gate)*x
    o_ref[...] = out.astype(o_ref.dtype)


def prepare_highway_params(w_proj, b_proj, w_gate, b_gate, param_dtype=None):
    """Fuse + transpose the PyTorch-style (out, in) Linear params ONCE.

    Returns (w_fused, b_fused): (E, 2E) weight (optionally cast to bf16 for
    the MXU fast path / v7x VMEM budget) and (1, 2E) f32 bias.  Call this
    outside the hot loop so repeated highway calls don't re-transpose in HBM.
    """
    E = w_proj.shape[0]
    w_fused = jnp.concatenate(
        [jnp.transpose(w_proj), jnp.transpose(w_gate)], axis=1)   # (E, 2E)
    if param_dtype is not None:
        w_fused = w_fused.astype(param_dtype)
    b_fused = jnp.concatenate([b_proj, b_gate]).astype(jnp.float32).reshape(1, 2 * E)
    return w_fused, b_fused


def highway_pallas_prepared(x, w_fused, b_fused, *, tm=256):
    """x: (N, E) rows; w_fused: (E, 2E); b_fused: (1, 2E)."""
    N, E = x.shape
    assert w_fused.shape == (E, 2 * E)

    # Big row tile by default (MXU-width aligned), clamped to the problem size.
    tm_eff = _round_up(max(8, min(tm, _round_up(N, 8))), 8)
    n_pad = _round_up(N, tm_eff)
    x_in = jnp.pad(x, ((0, n_pad - N), (0, 0))) if n_pad != N else x
    grid = (n_pad // tm_eff,)

    itemsize = jnp.dtype(x.dtype).itemsize
    # Resident weights/bias (double-buffered by the pipeline), double-buffered
    # x/out tiles, f32 intermediates, plus margin.  Never below the default.
    vmem_bytes = int(
        2 * (w_fused.nbytes + b_fused.nbytes)
        + 4 * tm_eff * E * itemsize
        + 8 * tm_eff * E * 4
        + (1 << 22))
    vmem_bytes = min(max(vmem_bytes, 32 * 1024 * 1024), 128 * 1024 * 1024)

    cost = pl.CostEstimate(
        flops=int(2 * N * E * 2 * E + 8 * N * E),
        transcendentals=int(N * E),
        bytes_accessed=int(2 * x.nbytes + w_fused.nbytes + b_fused.nbytes),
    )

    out = pl.pallas_call(
        highway_kernel,
        out_shape=jax.ShapeDtypeStruct((n_pad, E), x.dtype),
        grid_spec=pltpu.PrefetchScalarGridSpec(
            num_scalar_prefetch=0,
            grid=grid,
            in_specs=[
                pl.BlockSpec((tm_eff, E), lambda i: (i, 0)),   # x tile
                pl.BlockSpec((E, 2 * E), lambda i: (0, 0)),    # fused weight
                pl.BlockSpec((1, 2 * E), lambda i: (0, 0)),    # fused bias
            ],
            out_specs=pl.BlockSpec((tm_eff, E), lambda i: (i, 0)),
        ),
        compiler_params=pltpu.CompilerParams(
            dimension_semantics=("parallel",),
            vmem_limit_bytes=vmem_bytes,
        ),
        cost_estimate=cost,
    )(x_in, w_fused, b_fused)
    return out[:N] if n_pad != N else out


def highway_pallas(x, w_proj, b_proj, w_gate, b_gate, *, tm=256, param_dtype=None):
    """One-shot convenience wrapper (prefer prepare_highway_params for reuse)."""
    w_fused, b_fused = prepare_highway_params(
        w_proj, b_proj, w_gate, b_gate, param_dtype=param_dtype)
    return highway_pallas_prepared(x, w_fused, b_fused, tm=tm)


def highway_ref(x, w_proj, b_proj, w_gate, b_gate):
    proj = jax.nn.relu(x @ w_proj.T + b_proj)
    gate = jax.nn.sigmoid(x @ w_gate.T + b_gate)
    return gate * proj + (1.0 - gate) * x


if __name__ == "__main__":
    embed_size = 128                    # E (lane-aligned)
    batch, seq = 2, 8                   # flattened rows
    N = batch * seq

    key = jax.random.PRNGKey(0)
    kx, kwp, kbp, kwg, kbg, kx2 = jax.random.split(key, 6)

    # PyTorch Linear shapes: weight (out, in), bias (out,)
    scale = 1.0 / jnp.sqrt(embed_size)
    x = jax.random.normal(kx, (N, embed_size), dtype=jnp.float32)
    w_proj = jax.random.uniform(kwp, (embed_size, embed_size), jnp.float32, -scale, scale)
    b_proj = jax.random.uniform(kbp, (embed_size,), jnp.float32, -scale, scale)
    w_gate = jax.random.uniform(kwg, (embed_size, embed_size), jnp.float32, -scale, scale)
    b_gate = jax.random.uniform(kbg, (embed_size,), jnp.float32, -scale, scale)

    # --- f32 path (exact check); params fused/transposed once and reused ------
    w_fused, b_fused = prepare_highway_params(w_proj, b_proj, w_gate, b_gate)
    out = jax.block_until_ready(highway_pallas_prepared(x, w_fused, b_fused))
    ref = highway_ref(x, w_proj, b_proj, w_gate, b_gate)
    assert out.shape == (N, embed_size)
    assert jnp.allclose(out, ref, atol=1e-5, rtol=1e-5), "f32 mismatch vs reference"

    # --- ragged-N + bf16-weight path (exercises tail padding + MXU fast path) --
    N2 = 300                            # not a multiple of the row tile
    x2 = jax.random.normal(kx2, (N2, embed_size), dtype=jnp.float32)
    out2 = jax.block_until_ready(
        highway_pallas(x2, w_proj, b_proj, w_gate, b_gate,
                       tm=256, param_dtype=jnp.bfloat16))
    ref2 = highway_ref(x2, w_proj, b_proj, w_gate, b_gate)
    assert out2.shape == (N2, embed_size)
    assert jnp.allclose(out2, ref2, atol=3e-2, rtol=3e-2), "bf16 mismatch vs reference"

    print("KERNEL_OK")
</pallas_src>

<mosaic_0001>
module attributes {stable_mosaic.version = 11 : i64} {
  func.func @highway_kernel(%arg0: i32, %arg1: memref<16x128xf32, #tpu.memory_space<vmem>>, %arg2: memref<128x256xf32, #tpu.memory_space<vmem>>, %arg3: memref<1x256xf32, #tpu.memory_space<vmem>>, %arg4: memref<16x128xf32, #tpu.memory_space<vmem>>) attributes {dimension_semantics = [#tpu.dimension_semantics<parallel>], iteration_bounds = array<i64: 1>, scalar_prefetch = 0 : i64, scratch_operands = 0 : i64, tpu.core_type = #tpu.core_type<tc>, window_params = [{transform_indices = @transform_0, window_bounds = array<i64: 16, 128>}, {pipeline_mode = #tpu.pipeline_mode<synchronous>, transform_indices = @transform_1, window_bounds = array<i64: 128, 256>}, {pipeline_mode = #tpu.pipeline_mode<synchronous>, transform_indices = @transform_2, window_bounds = array<i64: 1, 256>}, {transform_indices = @transform_3, window_bounds = array<i64: 16, 128>}]} {
    %c0 = arith.constant 0 : index
    %c0_0 = arith.constant 0 : index
    %0 = vector.load %arg1[%c0, %c0_0] : memref<16x128xf32, #tpu.memory_space<vmem>>, vector<16x128xf32>
    %c0_1 = arith.constant 0 : index
    %c0_2 = arith.constant 0 : index
    %1 = vector.load %arg2[%c0_1, %c0_2] : memref<128x256xf32, #tpu.memory_space<vmem>>, vector<128x256xf32>
    %cst = arith.constant dense<0.000000e+00> : vector<16x256xf32>
    %2 = tpu.matmul %0, %1, %cst {dimension_numbers = #tpu.dot_dimension_numbers<[1], [0], [0], [1], [0, 0, 1, 1], [], []>} : vector<16x128xf32>, vector<128x256xf32>, vector<16x256xf32> -> vector<16x256xf32>
    %c0_3 = arith.constant 0 : index
    %c0_4 = arith.constant 0 : index
    %3 = vector.load %arg3[%c0_3, %c0_4] : memref<1x256xf32, #tpu.memory_space<vmem>>, vector<1x256xf32>
    %4 = vector.broadcast %3 : vector<1x256xf32> to vector<16x256xf32>
    %5 = arith.addf %2, %4 : vector<16x256xf32>
    %6 = vector.extract_strided_slice %5 {offsets = [0, 0], sizes = [16, 128], strides = [1, 1]} : vector<16x256xf32> to vector<16x128xf32>
    %cst_5 = arith.constant 0.000000e+00 : f32
    %7 = vector.broadcast %cst_5 : f32 to vector<16x128xf32>
    %8 = arith.maximumf %6, %7 : vector<16x128xf32>
    %9 = vector.extract_strided_slice %5 {offsets = [0, 128], sizes = [16, 128], strides = [1, 1]} : vector<16x256xf32> to vector<16x128xf32>
    %10 = arith.negf %9 : vector<16x128xf32>
    %11 = math.exp %10 : vector<16x128xf32>
    %cst_6 = arith.constant 1.000000e+00 : f32
    %12 = vector.broadcast %cst_6 : f32 to vector<16x128xf32>
    %13 = arith.addf %12, %11 : vector<16x128xf32>
    %14 = arith.divf %12, %13 : vector<16x128xf32>
    %15 = arith.subf %8, %0 : vector<16x128xf32>
    %16 = arith.mulf %14, %15 : vector<16x128xf32>
    %17 = arith.addf %0, %16 : vector<16x128xf32>
    %c0_7 = arith.constant 0 : index
    %c0_8 = arith.constant 0 : index
    %18 = vector.load %arg4[%c0_7, %c0_8] : memref<16x128xf32, #tpu.memory_space<vmem>>, vector<16x128xf32>
    tpu.vector_store %arg4[%c0_7, %c0_8], %17 {strides = array<i32>} : memref<16x128xf32, #tpu.memory_space<vmem>>, vector<16x128xf32>,
    return
  }
  func.func @transform_0(%arg0: i32) -> (i32, i32) {
    %c0_i32 = arith.constant 0 : i32
    %c0_i32_0 = arith.constant 0 : i32
    return %arg0, %c0_i32 : i32, i32
  }
  func.func @transform_1(%arg0: i32) -> (i32, i32) {
    %c0_i32 = arith.constant 0 : i32
    %c0_i32_0 = arith.constant 0 : i32
    %c0_i32_1 = arith.constant 0 : i32
    return %c0_i32, %c0_i32_0 : i32, i32
  }
  func.func @transform_2(%arg0: i32) -> (i32, i32) {
    %c0_i32 = arith.constant 0 : i32
    %c0_i32_0 = arith.constant 0 : i32
    %c0_i32_1 = arith.constant 0 : i32
    return %c0_i32, %c0_i32_0 : i32, i32
  }
  func.func @transform_3(%arg0: i32) -> (i32, i32) {
    %c0_i32 = arith.constant 0 : i32
    %c0_i32_0 = arith.constant 0 : i32
    return %arg0, %c0_i32 : i32, i32
  }
}

</mosaic_0001>

<llo_original>
// kernel: tpu_custom_call.1
$region0: #{tpu_custom_call.1}
  #allocation0 [shape = 'u32[]', space=smem, size = 0x4, offset = 0x4, fixed_abs, tag = 'smem constant byte address 0x4 - core index']
  #allocation1 [shape = 'u32[72,128]{1,0:T(1,128)}', space=vmem, size = 0x9000, scoped, tag = 'internal scratch']
  %s0 = inlined_call_operand.hbm [shape: f32[16,128], index: 0, kind: input, shape index: {}]
  %s1 = inlined_call_operand.hbm [shape: f32[128,256], index: 1, kind: input, shape index: {}]
  %s2 = inlined_call_operand.hbm [shape: f32[1,256], index: 2, kind: input, shape index: {}]
  %s3 = inlined_call_operand.hbm [shape: f32[16,128], index: 3, kind: output, shape index: {}]
  %s4 = sld [smem:[#allocation0]]
  $region34: #{tpu_custom_call.1} parent=0
    _
  %s6 = ssub.s32 1, %s4
  %s7 = scalar_select 0, %s6, %s4
  $region1: #{tpu_custom_call.1} parent=0
    #allocation2 [shape = 'u8[8192]{0}', space=vmem, size = 0x2000, scoped, tag = 'input window, operand 0, single buffered']
    #allocation3 [shape = 's32[1]{0}', space=sflag, size = 0x4, scoped, tag = 'scoped memory for tpu_custom_call.1']
    #allocation4 [shape = 's32[1]{0}', space=sflag, size = 0x4, scoped, tag = 'scoped memory for tpu_custom_call.1']
    #allocation5 [shape = 'u8[131072]{0}', space=vmem, size = 0x20000, scoped, tag = 'input window, operand 1, single buffered']
    #allocation6 [shape = 's32[1]{0}', space=sflag, size = 0x4, scoped, tag = 'scoped memory for tpu_custom_call.1']
    #allocation7 [shape = 'u8[1024]{0}', space=vmem, size = 0x400, scoped, tag = 'input window, operand 2, single buffered']
    #allocation8 [shape = 'u8[8192]{0}', space=vmem, size = 0x2000, scoped, tag = 'output window, operand 0, single buffered']
    %8 = vsyncpa [#allocation3], 0
    %9 = vsyncpa [#allocation6], 0
    %10 = vsyncpa [#allocation4], 0
    // Predicated region
    $region2: #{tpu_custom_call.1} parent=1 // pred_check
      _
    $region3: #{tpu_custom_call.1} parent=1 // pred_check_branch
      %12 = sbr.rel (0) target = $region5
    $region4: #{tpu_custom_call.1} parent=1 // pred_region
      %14 = vsyncadd [#allocation3], 0
      %s15 = sshll.u32 %s0, 4
      %s16 = int_to_ptr.hbm [resolvable:$true] %s15
      %s17 = sshll.u32 [#allocation2], 4
      %s18 = int_to_ptr.vmem [resolvable:$true] %s17
      %23 = dma.hbm_to_vmem [thread:$0]  %s16, 256, %s18, [#allocation3], 128, 128, 8
    $region5: #{tpu_custom_call.1} parent=1 // pred_fallthru
      _
    // Predicated region
    $region6: #{tpu_custom_call.1} parent=1 // pred_check
      _
    $region7: #{tpu_custom_call.1} parent=1 // pred_check_branch
      %25 = sbr.rel (0) target = $region9
    $region8: #{tpu_custom_call.1} parent=1 // pred_region
      %27 = vsyncadd [#allocation6], 0
      %s28 = sshll.u32 %s1, 4
      %s29 = int_to_ptr.hbm [resolvable:$true] %s28
      %s30 = sshll.u32 [#allocation5], 4
      %s31 = int_to_ptr.vmem [resolvable:$true] %s30
      %36 = dma.hbm_to_vmem [thread:$0]  %s29, 4096, %s31, [#allocation6], 256, 256, 16
    $region9: #{tpu_custom_call.1} parent=1 // pred_fallthru
      _
    // Predicated region
    $region10: #{tpu_custom_call.1} parent=1 // pred_check
      _
    $region11: #{tpu_custom_call.1} parent=1 // pred_check_branch
      %38 = sbr.rel (0) target = $region13
    $region12: #{tpu_custom_call.1} parent=1 // pred_region
      %40 = vsyncadd [#allocation6], 0
      %s42 = sshll.u32 %s2, 4
      %s43 = int_to_ptr.hbm [resolvable:$true] %s42
      %s44 = sshll.u32 [#allocation7], 4
      %s45 = int_to_ptr.vmem [resolvable:$true] %s44
      %47 = dma.hbm_to_vmem [thread:$0]  %s43, 32, %s45, [#allocation6]
    $region13: #{tpu_custom_call.1} parent=1 // pred_fallthru
      _
    // Predicated region
    $region14: #{tpu_custom_call.1} parent=1 // pred_check
      _
    $region15: #{tpu_custom_call.1} parent=1 // pred_check_branch
      %49 = sbr.rel (0) target = $region17
    $region16: #{tpu_custom_call.1} parent=1 // pred_region
      %51 = dma.done [#allocation3], 256
    $region17: #{tpu_custom_call.1} parent=1 // pred_fallthru
      _
    // Predicated region
    $region18: #{tpu_custom_call.1} parent=1 // pred_check
      _
    $region19: #{tpu_custom_call.1} parent=1 // pred_check_branch
      %53 = sbr.rel (0) target = $region21
    $region20: #{tpu_custom_call.1} parent=1 // pred_region
      %55 = dma.done [#allocation6], 4096
    $region21: #{tpu_custom_call.1} parent=1 // pred_fallthru
      _
    // Predicated region
    $region22: #{tpu_custom_call.1} parent=1 // pred_check
      _
    $region23: #{tpu_custom_call.1} parent=1 // pred_check_branch
      %57 = sbr.rel (0) target = $region25
    $region24: #{tpu_custom_call.1} parent=1 // pred_region
      %59 = dma.done [#allocation6], 32
    $region25: #{tpu_custom_call.1} parent=1 // pred_fallthru
      _
    %v60 = vld [vmem:[#allocation2] sm:$0xff]
    %v61 = vld [vmem:[#allocation2 + $0x8] sm:$0xff]
    %v62 = vld [vmem:[#allocation5] sm:$0xff]
    %v63 = vld [vmem:[#allocation5 + $0x8] sm:$0xff]
    %v64 = vld [vmem:[#allocation5 + $0x10] sm:$0xff]
    %v65 = vld [vmem:[#allocation5 + $0x18] sm:$0xff]
    %v66 = vld [vmem:[#allocation5 + $0x20] sm:$0xff]
    %v67 = vld [vmem:[#allocation5 + $0x28] sm:$0xff]
    %v68 = vld [vmem:[#allocation5 + $0x30] sm:$0xff]
    %v69 = vld [vmem:[#allocation5 + $0x38] sm:$0xff]
    %v70 = vld [vmem:[#allocation5 + $0x40] sm:$0xff]
    %v71 = vld [vmem:[#allocation5 + $0x48] sm:$0xff]
    %v72 = vld [vmem:[#allocation5 + $0x50] sm:$0xff]
    %v73 = vld [vmem:[#allocation5 + $0x58] sm:$0xff]
    %v74 = vld [vmem:[#allocation5 + $0x60] sm:$0xff]
    %v75 = vld [vmem:[#allocation5 + $0x68] sm:$0xff]
    %v76 = vld [vmem:[#allocation5 + $0x70] sm:$0xff]
    %v77 = vld [vmem:[#allocation5 + $0x78] sm:$0xff]
    %v78 = vld [vmem:[#allocation5 + $0x80] sm:$0xff]
    %v79 = vld [vmem:[#allocation5 + $0x88] sm:$0xff]
    %v80 = vld [vmem:[#allocation5 + $0x90] sm:$0xff]
    %v81 = vld [vmem:[#allocation5 + $0x98] sm:$0xff]
    %v82 = vld [vmem:[#allocation5 + $0xa0] sm:$0xff]
    %v83 = vld [vmem:[#allocation5 + $0xa8] sm:$0xff]
    %v84 = vld [vmem:[#allocation5 + $0xb0] sm:$0xff]
    %v85 = vld [vmem:[#allocation5 + $0xb8] sm:$0xff]
    %v86 = vld [vmem:[#allocation5 + $0xc0] sm:$0xff]
    %v87 = vld [vmem:[#allocation5 + $0xc8] sm:$0xff]
    %v88 = vld [vmem:[#allocation5 + $0xd0] sm:$0xff]
    %v89 = vld [vmem:[#allocation5 + $0xd8] sm:$0xff]
    %v90 = vld [vmem:[#allocation5 + $0xe0] sm:$0xff]
    %v91 = vld [vmem:[#allocation5 + $0xe8] sm:$0xff]
    %v92 = vld [vmem:[#allocation5 + $0xf0] sm:$0xff]
    %v93 = vld [vmem:[#allocation5 + $0xf8] sm:$0xff]
    %v94 = vld [vmem:[#allocation7] sm:$0x3]
    %v96 = vperm.slane %v94, 0
    %v97 = vperm.slane %v94, 1
    %100 = vmatpush.msra.mxu0 %v92
    %101 = vmatpush.msra.mxu0 %v90
    %102 = vmatpush.msra.mxu0 %v88
    %103 = vmatpush.msra.mxu0 %v86
    %104 = vmatpush.msra.mxu0 %v84
    %105 = vmatpush.msra.mxu0 %v82
    %106 = vmatpush.msra.mxu0 %v80
    %107 = vmatpush.msra.mxu0 %v78
    %108 = vmatpush.msra.mxu0 %v76
    %109 = vmatpush.msra.mxu0 %v74
    %110 = vmatpush.msra.mxu0 %v72
    %111 = vmatpush.msra.mxu0 %v70
    %112 = vmatpush.msra.mxu0 %v68
    %113 = vmatpush.msra.mxu0 %v66
    %114 = vmatpush.msra.mxu0 %v64
    %115 = vmatpush.msra.mxu0 %v62
    %116 = vmatmul.f32.gmra.mxu0 %v60
    %v117 = vpop.f32.mrf.mxu0
    %v118 = vadd.f32 %v96, %v117
    %119 = vmatmul.f32.gmra.mxu0 %v61
    %v120 = vpop.f32.mrf.mxu0
    %v121 = vadd.f32 %v96, %v120
    %122 = vdwg.mxu0
    %123 = vmatpush.msra.mxu0 %v93
    %124 = vmatpush.msra.mxu0 %v91
    %125 = vmatpush.msra.mxu0 %v89
    %126 = vmatpush.msra.mxu0 %v87
    %127 = vmatpush.msra.mxu0 %v85
    %128 = vmatpush.msra.mxu0 %v83
    %129 = vmatpush.msra.mxu0 %v81
    %130 = vmatpush.msra.mxu0 %v79
    %131 = vmatpush.msra.mxu0 %v77
    %132 = vmatpush.msra.mxu0 %v75
    %133 = vmatpush.msra.mxu0 %v73
    %134 = vmatpush.msra.mxu0 %v71
    %135 = vmatpush.msra.mxu0 %v69
    %136 = vmatpush.msra.mxu0 %v67
    %137 = vmatpush.msra.mxu0 %v65
    %138 = vmatpush.msra.mxu0 %v63
    %139 = vmatmul.f32.gmra.mxu0 %v60
    %v140 = vpop.f32.mrf.mxu0
    %v141 = vadd.f32 %v97, %v140
    %142 = vmatmul.f32.gmra.mxu0 %v61
    %v143 = vpop.f32.mrf.mxu0
    %v144 = vadd.f32 %v97, %v143
    %145 = vdwg.mxu0
    %v146 = vmax.f32 %v118, 0.0
    %v147 = vmax.f32 %v121, 0.0
    %v148 = vxor.u32 %v141, 2147483648
    %v149 = vxor.u32 %v144, 2147483648
    %v150 = vmul.f32 %v148, 1.442695
    %v151 = vpow.pop %v150
    %v152 = vmul.f32 %v149, 1.442695
    %v153 = vpow.pop %v152
    %v154 = vadd.f32 %v151, 1.0
    %v155 = vadd.f32 %v153, 1.0
    %v156 = vrcp.pop %v154
    %v157 = vmul.f32 %v154, %v156
    %v158 = vsub.f32 1.0, %v157
    %v159 = vmul.f32 %v156, %v158
    %v160 = vadd.f32 %v156, %v159
    %vm161 = vweird.f32 %v154
    %vm162 = vweird.f32 %v156
    %vm163 = vmor %vm161, %vm162
    %v164 = vsel %vm163, %v156, %v160
    %v165 = vand.u32 2147483647, %v154
    %vm166 = vcmp.eq.f32.partialorder %v165, 8.507059e+37
    %v167 = vand.u32 %v154, 2147483648
    %v168 = vor.u32 1.1754944e-38, %v167
    %v169 = vsel %vm166, %v168, %v164
    %v170 = vmul.f32 1.0, %v169
    %v171 = vrcp.pop %v155
    %v172 = vmul.f32 %v155, %v171
    %v173 = vsub.f32 1.0, %v172
    %v174 = vmul.f32 %v171, %v173
    %v175 = vadd.f32 %v171, %v174
    %vm176 = vweird.f32 %v155
    %vm177 = vweird.f32 %v171
    %vm178 = vmor %vm176, %vm177
    %v179 = vsel %vm178, %v171, %v175
    %v180 = vand.u32 2147483647, %v155
    %vm181 = vcmp.eq.f32.partialorder %v180, 8.507059e+37
    %v182 = vand.u32 %v155, 2147483648
    %v183 = vor.u32 1.1754944e-38, %v182
    %v184 = vsel %vm181, %v183, %v179
    %v185 = vmul.f32 1.0, %v184
    %v186 = vsub.f32 %v146, %v60
    %v187 = vsub.f32 %v147, %v61
    %v188 = vmul.f32 %v170, %v186
    %v189 = vmul.f32 %v185, %v187
    %v190 = vadd.f32 %v60, %v188
    %v191 = vadd.f32 %v61, %v189
    %192 = vst [vmem:[#allocation8] sm:$0xff] %v190
    %193 = vst [vmem:[#allocation8 + $0x8] sm:$0xff] %v191
    // Predicated region
    $region26: #{tpu_custom_call.1} parent=1 // pred_check
      _
    $region27: #{tpu_custom_call.1} parent=1 // pred_check_branch
      %195 = sbr.rel (0) target = $region29
    $region28: #{tpu_custom_call.1} parent=1 // pred_region
      %197 = vsyncadd [#allocation4], 0
      %s198 = sshll.u32 [#allocation8], 4
      %s199 = int_to_ptr.vmem [resolvable:$true] %s198
      %s200 = sshll.u32 %s3, 4
      %s201 = int_to_ptr.hbm [resolvable:$true] %s200
      %206 = dma.vmem_to_hbm [thread:$0]  %s199, 256, %s201, [#allocation4], 128, 128, 8
    $region29: #{tpu_custom_call.1} parent=1 // pred_fallthru
      _
    // Predicated region
    $region30: #{tpu_custom_call.1} parent=1 // pred_check
      _
    $region31: #{tpu_custom_call.1} parent=1 // pred_check_branch
      %208 = sbr.rel (0) target = $region33
    $region32: #{tpu_custom_call.1} parent=1 // pred_region
      %210 = dma.done [#allocation4], 256
    $region33: #{tpu_custom_call.1} parent=1 // pred_fallthru
      _
    %211 = vsyncpa [#allocation3], 1
    %212 = vsyncpa [#allocation6], 1
    %213 = vsyncpa [#allocation4], 1

</llo_original>
